<compile_context>
chip_gen: v7x
topology: tpu7x:2x2x1
jax: 0.10.0
libtpu: 0.0.40
codegen_flags: <defaults>
</compile_context>

<pallas_src>
import functools

import jax
import jax.numpy as jnp
from jax import lax
from jax.experimental import pallas as pl
from jax.experimental.pallas import tpu as pltpu

_SQRT2 = 1.4142135623730951  # distance between two distinct one-hot rows


def _p_hausdorff_idx_kernel(ia_ref, ib_ref, out_ref, *, tol):
    """Perceptual Hausdorff distance between two sets of one-hot rows.

    ia_ref: (KA, 1) int32 flat indices of set A points (VMEM)
    ib_ref: (1, KB) int32 flat indices of set B points (VMEM)

    dist(i, j) = sqrt(2) * (idx_a[i] != idx_b[j])   (== torch.cdist on one-hots)
    result     = mean_i min_j relu(dist - tol) + mean_j min_i relu(dist - tol)
    """
    ia = ia_ref[...]                                    # (KA, 1) int32
    ib = ib_ref[...]                                    # (1, KB) int32
    neq = (ia != ib).astype(jnp.float32)                # (KA, KB)
    dist = _SQRT2 * neq                                 # pairwise distances
    t = jnp.maximum(dist - tol, 0.0)                    # relu(dist - tol)
    m1 = jnp.min(t, axis=1, keepdims=True)              # (KA, 1): min over B
    m2 = jnp.min(t, axis=0, keepdims=True)              # (1, KB): min over A
    out_ref[...] = (jnp.mean(m1, axis=0, keepdims=True)
                    + jnp.mean(m2, axis=1, keepdims=True))   # (1, 1)


def p_hausdorff(idx_a, idx_b, tolerance=1.0):
    """idx_a: (KA,) int32, idx_b: (KB,) int32 flat point indices -> scalar f32."""
    ka = idx_a.shape[0]
    kb = idx_b.shape[0]
    ia = idx_a.reshape(ka, 1).astype(jnp.int32)
    ib = idx_b.reshape(1, kb).astype(jnp.int32)
    kernel = functools.partial(_p_hausdorff_idx_kernel, tol=float(tolerance))
    out = pl.pallas_call(
        kernel,
        out_shape=jax.ShapeDtypeStruct((1, 1), jnp.float32),
        in_specs=[pl.BlockSpec(memory_space=pltpu.MemorySpace.VMEM),
                  pl.BlockSpec(memory_space=pltpu.MemorySpace.VMEM)],
        out_specs=pl.BlockSpec(memory_space=pltpu.MemorySpace.VMEM),
    )(ia, ib)
    return out[0, 0]


# ----------------------------- JAX glue -------------------------------------

def _nearest_resize(x, out_h, out_w):
    """F.interpolate(..., size=(out_h, out_w)) default mode='nearest', NCHW."""
    n, c, h, w = x.shape
    hi = (jnp.arange(out_h) * h) // out_h
    wi = (jnp.arange(out_w) * w) // out_w
    return x[:, :, hi, :][:, :, :, wi]


def get_local_pre(pre_locals):
    """Assemble 4 local predictions into a 2h x 2w mosaic, resize to 512x512."""
    p0, p1, p2, p3 = pre_locals
    top = jnp.concatenate([p0, p1], axis=3)
    bot = jnp.concatenate([p2, p3], axis=3)
    pre_local = jnp.concatenate([top, bot], axis=2)
    return _nearest_resize(pre_local, 512, 512)


def get_point_indices(arr, num_points):
    """Return (num_points,) int32 flat indices of the selected skeleton points."""
    # TODO(synk): `skeletonize` is undefined in the reference module and
    # torch.nonzero has a data-dependent shape; use deterministic top-k point
    # selection as the skeleton-point stand-in.  Each selected point is the
    # one-hot row relu(mask - 1) + 1-at-coord of the reference, represented
    # here only by its flat index in the W*H space (the dense one-hot matrix
    # is never built).
    img = arr[0, 0]                         # (W, H)
    w, h = img.shape
    flat = img.reshape(-1)                  # (W*H,)
    _, idx = lax.top_k(flat, num_points)
    return idx.astype(jnp.int32)            # (K,)


def sim_loss(pre_global, pre_locals, tolerance=2.0,
             num_points_a=32, num_points_b=48):
    pre_local = get_local_pre(pre_locals)
    idx1 = get_point_indices(pre_global, num_points_a)
    idx2 = get_point_indices(pre_local, num_points_b)
    val = p_hausdorff(idx1, idx2, tolerance=tolerance)
    # Reference loops b over the batch but every iteration computes the same
    # value (get_points ignores b); the mean over the batch is therefore `val`.
    return val


if __name__ == "__main__":
    key = jax.random.PRNGKey(0)
    k1, k2, k3, k4, k5 = jax.random.split(key, 5)
    # pre_global must be 512x512 spatially so its flattened index space matches
    # the 512x512-interpolated local prediction (as required by torch.cdist in
    # the reference).
    pre_global = jax.random.uniform(k1, (2, 1, 512, 512), dtype=jnp.float32)
    pre_locals = [jax.random.uniform(k, (2, 1, 8, 8), dtype=jnp.float32)
                  for k in (k2, k3, k4, k5)]

    out = sim_loss(pre_global, pre_locals, tolerance=2.0)
    jax.block_until_ready(out)
    print("KERNEL_OK")
</pallas_src>

<mosaic_0001>
module attributes {stable_mosaic.version = 11 : i64} {
  func.func @_p_hausdorff_idx_kernel(%arg0: memref<32x1xi32, #tpu.memory_space<vmem>>, %arg1: memref<1x48xi32, #tpu.memory_space<vmem>>, %arg2: memref<1x1xf32, #tpu.memory_space<vmem>>) attributes {dimension_semantics = [], scalar_prefetch = 0 : i64, scratch_operands = 0 : i64, tpu.core_type = #tpu.core_type<tc>} {
    %c0 = arith.constant 0 : index
    %c0_0 = arith.constant 0 : index
    %0 = vector.load %arg0[%c0, %c0_0] : memref<32x1xi32, #tpu.memory_space<vmem>>, vector<32x1xi32>
    %c0_1 = arith.constant 0 : index
    %c0_2 = arith.constant 0 : index
    %1 = vector.load %arg1[%c0_1, %c0_2] : memref<1x48xi32, #tpu.memory_space<vmem>>, vector<1x48xi32>
    %2 = vector.broadcast %0 : vector<32x1xi32> to vector<32x48xi32>
    %3 = vector.broadcast %1 : vector<1x48xi32> to vector<32x48xi32>
    %4 = arith.cmpi ne, %2, %3 : vector<32x48xi32>
    %5 = arith.extui %4 : vector<32x48xi1> to vector<32x48xi32>
    %6 = arith.sitofp %5 : vector<32x48xi32> to vector<32x48xf32>
    %cst = arith.constant 1.41421354 : f32
    %7 = vector.broadcast %cst : f32 to vector<32x48xf32>
    %8 = arith.mulf %7, %6 : vector<32x48xf32>
    %cst_3 = arith.constant 2.000000e+00 : f32
    %9 = vector.broadcast %cst_3 : f32 to vector<32x48xf32>
    %10 = arith.subf %8, %9 : vector<32x48xf32>
    %cst_4 = arith.constant 0.000000e+00 : f32
    %11 = vector.broadcast %cst_4 : f32 to vector<32x48xf32>
    %12 = arith.maximumf %10, %11 : vector<32x48xf32>
    %cst_5 = arith.constant dense<0x7F800000> : vector<32xf32>
    %13 = vector.multi_reduction <minimumf>, %12, %cst_5 [1] : vector<32x48xf32> to vector<32xf32>
    %14 = vector.shape_cast %13 : vector<32xf32> to vector<32x1xf32>
    %cst_6 = arith.constant dense<0x7F800000> : vector<48xf32>
    %15 = vector.multi_reduction <minimumf>, %12, %cst_6 [0] : vector<32x48xf32> to vector<48xf32>
    %16 = vector.shape_cast %15 : vector<48xf32> to vector<1x48xf32>
    %cst_7 = arith.constant dense<0.000000e+00> : vector<1xf32>
    %17 = vector.multi_reduction <add>, %14, %cst_7 [0] : vector<32x1xf32> to vector<1xf32>
    %18 = vector.shape_cast %17 : vector<1xf32> to vector<1x1xf32>
    %cst_8 = arith.constant 3.200000e+01 : f32
    %19 = vector.broadcast %cst_8 : f32 to vector<1x1xf32>
    %20 = arith.divf %18, %19 : vector<1x1xf32>
    %cst_9 = arith.constant dense<0.000000e+00> : vector<1xf32>
    %21 = vector.multi_reduction <add>, %16, %cst_9 [1] : vector<1x48xf32> to vector<1xf32>
    %22 = vector.shape_cast %21 : vector<1xf32> to vector<1x1xf32>
    %cst_10 = arith.constant 4.800000e+01 : f32
    %23 = vector.broadcast %cst_10 : f32 to vector<1x1xf32>
    %24 = arith.divf %22, %23 : vector<1x1xf32>
    %25 = arith.addf %20, %24 : vector<1x1xf32>
    %c0_11 = arith.constant 0 : index
    %c0_12 = arith.constant 0 : index
    %26 = vector.load %arg2[%c0_11, %c0_12] : memref<1x1xf32, #tpu.memory_space<vmem>>, vector<1x1xf32>
    tpu.vector_store %arg2[%c0_11, %c0_12], %25 {strides = array<i32>} : memref<1x1xf32, #tpu.memory_space<vmem>>, vector<1x1xf32>,
    return
  }
}

</mosaic_0001>

<llo_original>
// kernel: tpu_custom_call.1
$region0: #{tpu_custom_call.1}
  #allocation0 [shape = 'u32[]', space=smem, size = 0x4, offset = 0x4, fixed_abs, tag = 'smem constant byte address 0x4 - core index']
  #allocation1 [shape = 'u32[144,128]{1,0:T(1,128)}', space=vmem, size = 0x12000, scoped, tag = 'internal scratch']
  %s0 = inlined_call_operand.vmem [shape: s32[32,1], index: 0, kind: input, shape index: {}]
  %s1 = inlined_call_operand.vmem [shape: s32[1,48], index: 1, kind: input, shape index: {}]
  %s2 = inlined_call_operand.hbm [shape: f32[1,1], index: 2, kind: output, shape index: {}]
  %s3 = sld [smem:[#allocation0]]
  $region18: #{tpu_custom_call.1} parent=0
    _
  %s5 = ssub.s32 1, %s3
  %s6 = scalar_select 0, %s5, %s3
  $region1: #{tpu_custom_call.1} parent=0
    #allocation2 [shape = 'u8[512]{0}', space=vmem, size = 0x400, scoped, tag = 'output window, operand 0, single buffered']
    #allocation3 [shape = 's32[1]{0}', space=sflag, size = 0x4, scoped, tag = 'scoped memory for tpu_custom_call.1']
    %7 = vsyncpa [#allocation3], 0
    // Predicated region
    $region2: #{tpu_custom_call.1} parent=1 // pred_check
      _
    $region3: #{tpu_custom_call.1} parent=1 // pred_check_branch
      %9 = sbr.rel (0) target = $region5
    $region4: #{tpu_custom_call.1} parent=1 // pred_region
      _
    $region5: #{tpu_custom_call.1} parent=1 // pred_fallthru
      _
    // Predicated region
    $region6: #{tpu_custom_call.1} parent=1 // pred_check
      _
    $region7: #{tpu_custom_call.1} parent=1 // pred_check_branch
      %11 = sbr.rel (0) target = $region9
    $region8: #{tpu_custom_call.1} parent=1 // pred_region
      _
    $region9: #{tpu_custom_call.1} parent=1 // pred_fallthru
      _
    %v12 = vld [vmem:[%s0] sm:$0xff]
    %v13 = vld [vmem:[%s0 + $0x8] sm:$0xff]
    %v14 = vld [vmem:[%s0 + $0x10] sm:$0xff]
    %v15 = vld [vmem:[%s0 + $0x18] sm:$0xff]
    %v16 = vld [vmem:[%s1] sm:$0x1]
    %17 = vset.pattern.permute.xlu0 0
    %18 = vperm.xlu0 %17, %v12
    %v19 = vpop.permute.xlu0 %18
    %20 = vset.pattern.permute.xlu0 0
    %21 = vperm.xlu0 %20, %v13
    %v22 = vpop.permute.xlu0 %21
    %23 = vset.pattern.permute.xlu0 0
    %24 = vperm.xlu0 %23, %v14
    %v25 = vpop.permute.xlu0 %24
    %26 = vset.pattern.permute.xlu0 0
    %27 = vperm.xlu0 %26, %v15
    %v28 = vpop.permute.xlu0 %27
    %v29 = vlaneseq
    %v30 = vshrl.u32 %v29, 7
    %v31 = vsub.s32 0, %v30
    %v32 = vrot.slane %v16, %v31
    %vm33 = vcmp.ne.s32.totalorder %v19, %v32
    %vm34 = vcmp.ne.s32.totalorder %v22, %v32
    %vm35 = vcmp.ne.s32.totalorder %v25, %v32
    %vm36 = vcmp.ne.s32.totalorder %v28, %v32
    %v37 = vsel %vm33, 1, 0
    %v38 = vsel %vm34, 1, 0
    %v39 = vsel %vm35, 1, 0
    %v40 = vsel %vm36, 1, 0
    %v41 = vcvt.s32.f32 %v37
    %v42 = vcvt.s32.f32 %v38
    %v43 = vcvt.s32.f32 %v39
    %v44 = vcvt.s32.f32 %v40
    %v45 = vmul.f32 %v41, 1.4142135
    %v46 = vmul.f32 %v42, 1.4142135
    %v47 = vmul.f32 %v43, 1.4142135
    %v48 = vmul.f32 %v44, 1.4142135
    %v49 = vsub.f32 %v45, 2.0
    %v50 = vsub.f32 %v46, 2.0
    %v51 = vsub.f32 %v47, 2.0
    %v52 = vsub.f32 %v48, 2.0
    %v53 = vmax.f32 %v49, 0.0
    %v54 = vmax.f32 %v50, 0.0
    %v55 = vmax.f32 %v51, 0.0
    %v56 = vmax.f32 %v52, 0.0
    %vm57 = vcmask 392192
    %v58 = vsel %vm57, %v53, inf
    %59 = vmin.xlane.f32.xlu0 %v58
    %v60 = vpop.xlane.xlu0 %59
    %v61 = vsel %vm57, %v54, inf
    %62 = vmin.xlane.f32.xlu0 %v61
    %v63 = vpop.xlane.xlu0 %62
    %v64 = vsel %vm57, %v55, inf
    %65 = vmin.xlane.f32.xlu0 %v64
    %v66 = vpop.xlane.xlu0 %65
    %v67 = vsel %vm57, %v56, inf
    %68 = vmin.xlane.f32.xlu0 %v67
    %v69 = vpop.xlane.xlu0 %68
    %v70 = vmin.f32 %v58, %v61
    %v71 = vmin.f32 %v64, %v67
    %v72 = vmin.f32 %v70, %v71
    %v73 = vrot.slane %v72, 4
    %v74 = vmin.f32 %v72, %v73
    %v75 = vrot.slane %v74, 2
    %v76 = vmin.f32 %v74, %v75
    %v77 = vrot.slane %v76, 1
    %v78 = vmin.f32 %v76, %v77
    %v79 = vadd.f32 %v60, %v63
    %v80 = vadd.f32 %v79, %v66
    %v81 = vadd.f32 %v80, %v69
    %v82 = vrot.slane %v81, 4
    %v83 = vadd.f32 %v81, %v82
    %v84 = vrot.slane %v83, 2
    %v85 = vadd.f32 %v83, %v84
    %v86 = vrot.slane %v85, 1
    %v87 = vadd.f32 %v85, %v86
    %v88 = vrcp.pop 32.0
    %v89 = vmul.f32 %v87, %v88
    %v90 = vsel %vm57, %v78, 0.0
    %91 = vadd.xlane.f32.xlu0 %v90
    %v92 = vpop.xlane.xlu0 %91
    %v93 = vrcp.pop 48.0
    %v94 = vmul.f32 %v92, %v93
    %v95 = vadd.f32 %v89, %v94
    %vm96 = vcmask 0
    %97 = vst.msk [vmem:[#allocation2] sm:$0x1] %vm96, %v95
    // Predicated region
    $region10: #{tpu_custom_call.1} parent=1 // pred_check
      _
    $region11: #{tpu_custom_call.1} parent=1 // pred_check_branch
      %99 = sbr.rel (0) target = $region13
    $region12: #{tpu_custom_call.1} parent=1 // pred_region
      %s101 = ssub.s32 16, 16
      %102 = vsyncadd [#allocation3], %s101
      %s104 = sshll.u32 [#allocation2], 4
      %s105 = int_to_ptr.vmem [resolvable:$true] %s104
      %107 = dma.vmem_to_hbm [thread:$0]  %s105, 16, %s2, [#allocation3]
    $region13: #{tpu_custom_call.1} parent=1 // pred_fallthru
      _
    // Predicated region
    $region14: #{tpu_custom_call.1} parent=1 // pred_check
      _
    $region15: #{tpu_custom_call.1} parent=1 // pred_check_branch
      %109 = sbr.rel (0) target = $region17
    $region16: #{tpu_custom_call.1} parent=1 // pred_region
      %110 = dma.done [#allocation3], 16
    $region17: #{tpu_custom_call.1} parent=1 // pred_fallthru
      _
    %111 = vsyncpa [#allocation3], 1

</llo_original>
